<compile_context>
chip_gen: v5e
topology: v5e:2x2
jax: 0.10.0
libtpu: 0.0.40
codegen_flags: <defaults>
</compile_context>

<pallas_src>
import functools

import jax
import jax.numpy as jnp
from jax.experimental import pallas as pl
from jax.experimental.pallas import tpu as pltpu


def _sdpa_kernel(*refs, inv_temperature, with_mask, with_attn):
    """One grid step: a (BB, TQ, .) tile of queries against all (BB, Lk, .) keys/values."""
    if with_mask:
        q_ref, k_ref, v_ref, m_ref = refs[:4]
        out_refs = refs[4:]
    else:
        q_ref, k_ref, v_ref = refs[:3]
        m_ref = None
        out_refs = refs[3:]
    out_ref = out_refs[0]
    attn_ref = out_refs[1] if with_attn else None

    # Fold 1/temperature into q: mul over (BB, TQ, D) instead of the (BB, TQ, Lk) scores.
    q = q_ref[...] * jnp.asarray(inv_temperature, dtype=q_ref.dtype)
    k = k_ref[...]
    v = v_ref[...]

    # q @ k^T by contracting last dims -- no explicit transpose of k. MXU, f32 accumulate.
    scores = jnp.einsum("bqd,bkd->bqk", q, k,
                        preferred_element_type=jnp.float32)

    if with_mask:
        # torch masked_fill(mask, -inf) semantics (before max-subtraction).
        scores = jnp.where(m_ref[...] != 0, jnp.float32(-jnp.inf), scores)

    # Numerically stable softmax over the key axis.
    row_max = jnp.max(scores, axis=-1, keepdims=True)
    e = jnp.exp(scores - row_max)                       # EUP
    denom = jnp.sum(e, axis=-1, keepdims=True)
    inv_denom = pl.reciprocal(denom, approx=True)       # EUP vrcp -- effectively free

    if with_attn:
        # attn is needed explicitly -> normalize the probabilities once and reuse for out.
        p = e * inv_denom
        attn_ref[...] = p.astype(attn_ref.dtype)
        out = jnp.einsum("bqk,bkd->bqd", p.astype(v.dtype), v,
                         preferred_element_type=jnp.float32)
    else:
        # attn not requested -> matmul the un-normalized e and scale the (TQ, Dv) result,
        # which is cheaper than scaling the (TQ, Lk) probability matrix when Dv < Lk.
        out = jnp.einsum("bqk,bkd->bqd", e.astype(v.dtype), v,
                         preferred_element_type=jnp.float32)
        out = out * inv_denom

    out_ref[...] = out.astype(out_ref.dtype)


def _choose_block_q(lq, max_block):
    """Largest multiple-of-8 divisor of Lq not exceeding max_block (or Lq itself)."""
    if lq <= max_block or lq % 8 != 0:
        return lq
    start = max_block - (max_block % 8)
    for tq in range(start, 7, -8):
        if lq % tq == 0:
            return tq
    return lq


def scaled_dot_product_attention(q, k, v, temperature, mask=None, *,
                                 return_attn=True, max_block_q=512):
    """Pallas implementation of ScaledDotProductAttention.forward (eval mode).

    Returns (output, attn) when return_attn=True (matching the module),
    otherwise just output (skips the B*Lq*Lk HBM writeback of attn).
    """
    B, Lq, D = q.shape
    Bk, Lk, Dk = k.shape
    Bv, Lkv, Dv = v.shape
    assert (Bk, Dk) == (B, D) and (Bv, Lkv) == (B, Lk)

    itemsize = jnp.dtype(q.dtype).itemsize

    # Tiny problems (e.g. the 2x8x8x32 demo): fuse the whole batch into a single grid
    # step -- grid steps are a serial loop on TPU and per-batch tiles this small are
    # pure per-step overhead. Larger problems: one batch per step, tile the q axis.
    per_batch_bytes = (Lq * D + Lk * D + Lk * Dv + Lq * Lk + Lq * Dv) * itemsize
    if B * per_batch_bytes <= 2 * 1024 * 1024:
        BB, TQ = B, Lq
    else:
        BB, TQ = 1, _choose_block_q(Lq, max_block_q)

    grid = (B // BB, Lq // TQ)

    kernel = functools.partial(
        _sdpa_kernel,
        inv_temperature=1.0 / float(temperature),
        with_mask=mask is not None,
        with_attn=return_attn,
    )

    in_specs = [
        pl.BlockSpec((BB, TQ, D), lambda b, t: (b, t, 0)),    # q tile
        pl.BlockSpec((BB, Lk, D), lambda b, t: (b, 0, 0)),    # k: VMEM-resident across q tiles
        pl.BlockSpec((BB, Lk, Dv), lambda b, t: (b, 0, 0)),   # v: VMEM-resident across q tiles
    ]
    inputs = [q, k, v]
    if mask is not None:
        in_specs.append(pl.BlockSpec((BB, TQ, Lk), lambda b, t: (b, t, 0)))
        inputs.append(mask.astype(jnp.int32))

    out_shape = [jax.ShapeDtypeStruct((B, Lq, Dv), q.dtype)]
    out_specs = [pl.BlockSpec((BB, TQ, Dv), lambda b, t: (b, t, 0))]
    if return_attn:
        # attn in the input dtype: consistent with the p used for `out`, and half the
        # HBM writeback when inputs are bf16.
        out_shape.append(jax.ShapeDtypeStruct((B, Lq, Lk), q.dtype))
        out_specs.append(pl.BlockSpec((BB, TQ, Lk), lambda b, t: (b, t, 0)))

    # Rough per-step VMEM footprint (x2 for double buffering); only raise the scoped
    # limit when the default would be too small (keeps headroom on 64 MiB v7x).
    est = (2 * itemsize * BB * (TQ * D + TQ * Dv + Lk * D + Lk * Dv)
           + 2 * 4 * BB * TQ * Lk          # f32 scores / mask intermediates
           + 2 * itemsize * BB * TQ * Lk)  # attn output tile
    params = dict(dimension_semantics=("parallel", "parallel"))
    if est > 24 * 1024 * 1024:
        params["vmem_limit_bytes"] = min(int(1.5 * est) + (4 << 20), 100 << 20)

    results = pl.pallas_call(
        kernel,
        out_shape=tuple(out_shape),
        grid_spec=pltpu.PrefetchScalarGridSpec(
            num_scalar_prefetch=0,
            grid=grid,
            in_specs=in_specs,
            out_specs=out_specs,
        ),
        compiler_params=pltpu.CompilerParams(**params),
    )(*inputs)

    if return_attn:
        out, attn = results
        return out, attn
    return results[0]


def _reference(q, k, v, temperature, mask=None):
    attn = jnp.einsum("bqd,bkd->bqk", q, k) / temperature
    if mask is not None:
        attn = jnp.where(mask, -jnp.inf, attn)
    attn = jax.nn.softmax(attn, axis=-1)
    out = jnp.einsum("bqk,bkd->bqd", attn, v)
    return out, attn


if __name__ == "__main__":
    key = jax.random.PRNGKey(0)
    kq, kk, kv, km = jax.random.split(key, 4)

    B, Lq, Lk, D = 2, 8, 8, 32
    temperature = float(D) ** 0.5

    q = jax.random.normal(kq, (B, Lq, D), dtype=jnp.float32)
    k = jax.random.normal(kk, (B, Lk, D), dtype=jnp.float32)
    v = jax.random.normal(kv, (B, Lk, D), dtype=jnp.float32)

    # Tolerances account for the approximate (EUP) reciprocal in the softmax.
    def _close(a, b):
        return jnp.allclose(a, b, atol=1e-2, rtol=1e-2)

    # Unmasked path (module default).
    out, attn = scaled_dot_product_attention(q, k, v, temperature)
    jax.block_until_ready((out, attn))
    out_ref, attn_ref = _reference(q, k, v, temperature)
    assert _close(out, out_ref), "output mismatch"
    assert _close(attn, attn_ref), "attn mismatch"

    # Masked path (torch masked_fill(mask, -inf) semantics); keep at least one
    # unmasked key per query so no row is all -inf.
    mask = jax.random.bernoulli(km, 0.3, (B, Lq, Lk))
    mask = mask.at[:, :, 0].set(False)
    out_m, attn_m = scaled_dot_product_attention(q, k, v, temperature, mask=mask)
    jax.block_until_ready((out_m, attn_m))
    out_mref, attn_mref = _reference(q, k, v, temperature, mask=mask)
    assert _close(out_m, out_mref), "masked output mismatch"
    assert _close(attn_m, attn_mref), "masked attn mismatch"

    # Output-only path (skips the big attn HBM writeback; normalizes post-matmul).
    out_only = scaled_dot_product_attention(q, k, v, temperature, return_attn=False)
    jax.block_until_ready(out_only)
    assert _close(out_only, out_ref), "output-only mismatch"

    print("KERNEL_OK")
</pallas_src>

<mosaic_0001>
module attributes {stable_mosaic.version = 11 : i64} {
  func.func @_sdpa_kernel(%arg0: i32, %arg1: i32, %arg2: memref<2x8x32xf32, #tpu.memory_space<vmem>>, %arg3: memref<2x8x32xf32, #tpu.memory_space<vmem>>, %arg4: memref<2x8x32xf32, #tpu.memory_space<vmem>>, %arg5: memref<2x8x32xf32, #tpu.memory_space<vmem>>, %arg6: memref<2x8x8xf32, #tpu.memory_space<vmem>>) attributes {dimension_semantics = [#tpu.dimension_semantics<parallel>, #tpu.dimension_semantics<parallel>], iteration_bounds = array<i64: 1, 1>, scalar_prefetch = 0 : i64, scratch_operands = 0 : i64, tpu.core_type = #tpu.core_type<tc>, window_params = [{transform_indices = @transform_0, window_bounds = array<i64: 2, 8, 32>}, {transform_indices = @transform_1, window_bounds = array<i64: 2, 8, 32>}, {transform_indices = @transform_2, window_bounds = array<i64: 2, 8, 32>}, {transform_indices = @transform_3, window_bounds = array<i64: 2, 8, 32>}, {transform_indices = @transform_4, window_bounds = array<i64: 2, 8, 8>}]} {
    %c0 = arith.constant 0 : index
    %c0_0 = arith.constant 0 : index
    %c0_1 = arith.constant 0 : index
    %0 = vector.load %arg2[%c0, %c0_0, %c0_1] : memref<2x8x32xf32, #tpu.memory_space<vmem>>, vector<2x8x32xf32>
    %cst = arith.constant 0.176776692 : f32
    %1 = vector.broadcast %cst : f32 to vector<2x8x32xf32>
    %2 = arith.mulf %0, %1 : vector<2x8x32xf32>
    %c0_2 = arith.constant 0 : index
    %c0_3 = arith.constant 0 : index
    %c0_4 = arith.constant 0 : index
    %3 = vector.load %arg3[%c0_2, %c0_3, %c0_4] : memref<2x8x32xf32, #tpu.memory_space<vmem>>, vector<2x8x32xf32>
    %c0_5 = arith.constant 0 : index
    %c0_6 = arith.constant 0 : index
    %c0_7 = arith.constant 0 : index
    %4 = vector.load %arg4[%c0_5, %c0_6, %c0_7] : memref<2x8x32xf32, #tpu.memory_space<vmem>>, vector<2x8x32xf32>
    "tpu.trace_start"() <{level = 10 : i32, message = "bqd,bkd->bqk"}> : () -> ()
    %cst_8 = arith.constant dense<0.000000e+00> : vector<2x8x8xf32>
    %5 = tpu.matmul %2, %3, %cst_8 {dimension_numbers = #tpu.dot_dimension_numbers<[2], [2], [1], [1], [0, 0, 0, 1, 1, 1], [0], [0]>} : vector<2x8x32xf32>, vector<2x8x32xf32>, vector<2x8x8xf32> -> vector<2x8x8xf32>
    "tpu.trace_stop"() : () -> ()
    %cst_9 = arith.constant dense<0xFF800000> : vector<2x8xf32>
    %6 = vector.multi_reduction <maximumf>, %5, %cst_9 [2] : vector<2x8x8xf32> to vector<2x8xf32>
    %7 = vector.shape_cast %6 : vector<2x8xf32> to vector<2x8x1xf32>
    %8 = vector.broadcast %7 : vector<2x8x1xf32> to vector<2x8x8xf32>
    %9 = arith.subf %5, %8 : vector<2x8x8xf32>
    %10 = math.exp %9 : vector<2x8x8xf32>
    %cst_10 = arith.constant dense<0.000000e+00> : vector<2x8xf32>
    %11 = vector.multi_reduction <add>, %10, %cst_10 [2] : vector<2x8x8xf32> to vector<2x8xf32>
    %12 = vector.shape_cast %11 : vector<2x8xf32> to vector<2x8x1xf32>
    %13 = tpu.reciprocal %12 {approx = true} : vector<2x8x1xf32> -> vector<2x8x1xf32>
    %14 = vector.broadcast %13 : vector<2x8x1xf32> to vector<2x8x8xf32>
    %15 = arith.mulf %10, %14 : vector<2x8x8xf32>
    %c0_11 = arith.constant 0 : index
    %c0_12 = arith.constant 0 : index
    %c0_13 = arith.constant 0 : index
    %16 = vector.load %arg6[%c0_11, %c0_12, %c0_13] : memref<2x8x8xf32, #tpu.memory_space<vmem>>, vector<2x8x8xf32>
    tpu.vector_store %arg6[%c0_11, %c0_12, %c0_13], %15 {strides = array<i32>} : memref<2x8x8xf32, #tpu.memory_space<vmem>>, vector<2x8x8xf32>,
    "tpu.trace_start"() <{level = 10 : i32, message = "bqk,bkd->bqd"}> : () -> ()
    %cst_14 = arith.constant dense<0.000000e+00> : vector<2x8x32xf32>
    %17 = tpu.matmul %15, %4, %cst_14 {dimension_numbers = #tpu.dot_dimension_numbers<[2], [1], [1], [2], [0, 0, 0, 1, 1, 2], [0], [0]>} : vector<2x8x8xf32>, vector<2x8x32xf32>, vector<2x8x32xf32> -> vector<2x8x32xf32>
    "tpu.trace_stop"() : () -> ()
    %c0_15 = arith.constant 0 : index
    %c0_16 = arith.constant 0 : index
    %c0_17 = arith.constant 0 : index
    %18 = vector.load %arg5[%c0_15, %c0_16, %c0_17] : memref<2x8x32xf32, #tpu.memory_space<vmem>>, vector<2x8x32xf32>
    tpu.vector_store %arg5[%c0_15, %c0_16, %c0_17], %17 {strides = array<i32>} : memref<2x8x32xf32, #tpu.memory_space<vmem>>, vector<2x8x32xf32>,
    return
  }
  func.func @transform_0(%arg0: i32, %arg1: i32) -> (i32, i32, i32) {
    %c0_i32 = arith.constant 0 : i32
    %c0_i32_0 = arith.constant 0 : i32
    return %arg0, %arg1, %c0_i32 : i32, i32, i32
  }
  func.func @transform_1(%arg0: i32, %arg1: i32) -> (i32, i32, i32) {
    %c0_i32 = arith.constant 0 : i32
    %c0_i32_0 = arith.constant 0 : i32
    %c0_i32_1 = arith.constant 0 : i32
    return %arg0, %c0_i32, %c0_i32_0 : i32, i32, i32
  }
  func.func @transform_2(%arg0: i32, %arg1: i32) -> (i32, i32, i32) {
    %c0_i32 = arith.constant 0 : i32
    %c0_i32_0 = arith.constant 0 : i32
    %c0_i32_1 = arith.constant 0 : i32
    return %arg0, %c0_i32, %c0_i32_0 : i32, i32, i32
  }
  func.func @transform_3(%arg0: i32, %arg1: i32) -> (i32, i32, i32) {
    %c0_i32 = arith.constant 0 : i32
    %c0_i32_0 = arith.constant 0 : i32
    return %arg0, %arg1, %c0_i32 : i32, i32, i32
  }
  func.func @transform_4(%arg0: i32, %arg1: i32) -> (i32, i32, i32) {
    %c0_i32 = arith.constant 0 : i32
    %c0_i32_0 = arith.constant 0 : i32
    return %arg0, %arg1, %c0_i32 : i32, i32, i32
  }
}

</mosaic_0001>

<llo_original>
// kernel: tpu_custom_call.1
$region0: #{tpu_custom_call.1}
  #allocation0 [shape = 'u32[]', space=smem, size = 0x4, offset = 0x4, fixed_abs, tag = 'smem constant byte address 0x4 - core index']
  #allocation1 [shape = 'u32[72,128]{1,0:T(1,128)}', space=vmem, size = 0x9000, scoped, tag = 'internal scratch']
  %s0 = inlined_call_operand.hbm [shape: f32[2,8,32], index: 0, kind: input, shape index: {}]
  %s1 = inlined_call_operand.hbm [shape: f32[2,8,32], index: 1, kind: input, shape index: {}]
  %s2 = inlined_call_operand.hbm [shape: f32[2,8,32], index: 2, kind: input, shape index: {}]
  %s3 = inlined_call_operand.hbm [shape: f32[2,8,32], index: 3, kind: output, shape index: {0}]
  %s4 = inlined_call_operand.hbm [shape: f32[2,8,8], index: 4, kind: output, shape index: {1}]
  %5 = xla_tuple %s3, %s4
  %s6 = sld [smem:[#allocation0]]
  $region42: #{tpu_custom_call.1} parent=0
    _
  %s8 = ssub.s32 1, %s6
  %s9 = scalar_select 0, %s8, %s6
  $region1: #{tpu_custom_call.1} parent=0
    #allocation2 [shape = 'u8[8192]{0}', space=vmem, size = 0x2000, scoped, tag = 'input window, operand 0, single buffered']
    #allocation3 [shape = 's32[1]{0}', space=sflag, size = 0x4, scoped, tag = 'scoped memory for tpu_custom_call.1']
    #allocation4 [shape = 's32[1]{0}', space=sflag, size = 0x4, scoped, tag = 'scoped memory for tpu_custom_call.1']
    #allocation5 [shape = 'u8[8192]{0}', space=vmem, size = 0x2000, scoped, tag = 'input window, operand 1, single buffered']
    #allocation6 [shape = 's32[1]{0}', space=sflag, size = 0x4, scoped, tag = 'scoped memory for tpu_custom_call.1']
    #allocation7 [shape = 'u8[8192]{0}', space=vmem, size = 0x2000, scoped, tag = 'input window, operand 2, single buffered']
    #allocation8 [shape = 'u8[8192]{0}', space=vmem, size = 0x2000, scoped, tag = 'output window, operand 0, single buffered']
    #allocation9 [shape = 'u8[8192]{0}', space=vmem, size = 0x2000, scoped, tag = 'output window, operand 1, single buffered']
    #allocation10 [shape = 's32[1]{0}', space=sflag, size = 0x4, scoped, tag = 'scoped memory for tpu_custom_call.1']
    %10 = vsyncpa [#allocation3], 0
    %11 = vsyncpa [#allocation6], 0
    %12 = vsyncpa [#allocation4], 0
    %13 = vsyncpa [#allocation10], 0
    // Predicated region
    $region2: #{tpu_custom_call.1} parent=1 // pred_check
      _
    $region3: #{tpu_custom_call.1} parent=1 // pred_check_branch
      %15 = sbr.rel (0) target = $region5
    $region4: #{tpu_custom_call.1} parent=1 // pred_region
      %17 = vsyncadd [#allocation3], 0
      %s18 = sshll.u32 %s0, 4
      %s19 = int_to_ptr.hbm [resolvable:$true] %s18
      %s20 = sshll.u32 [#allocation2], 4
      %s21 = int_to_ptr.vmem [resolvable:$true] %s20
      %26 = dma.hbm_to_vmem [thread:$0]  %s19, 256, %s21, [#allocation3], 128, 128, 8
    $region5: #{tpu_custom_call.1} parent=1 // pred_fallthru
      _
    // Predicated region
    $region6: #{tpu_custom_call.1} parent=1 // pred_check
      _
    $region7: #{tpu_custom_call.1} parent=1 // pred_check_branch
      %28 = sbr.rel (0) target = $region9
    $region8: #{tpu_custom_call.1} parent=1 // pred_region
      %30 = vsyncadd [#allocation6], 0
      %s31 = sshll.u32 %s1, 4
      %s32 = int_to_ptr.hbm [resolvable:$true] %s31
      %s33 = sshll.u32 [#allocation5], 4
      %s34 = int_to_ptr.vmem [resolvable:$true] %s33
      %39 = dma.hbm_to_vmem [thread:$0]  %s32, 256, %s34, [#allocation6], 128, 128, 8
    $region9: #{tpu_custom_call.1} parent=1 // pred_fallthru
      _
    // Predicated region
    $region10: #{tpu_custom_call.1} parent=1 // pred_check
      _
    $region11: #{tpu_custom_call.1} parent=1 // pred_check_branch
      %41 = sbr.rel (0) target = $region13
    $region12: #{tpu_custom_call.1} parent=1 // pred_region
      %43 = vsyncadd [#allocation6], 0
      %s44 = sshll.u32 %s2, 4
      %s45 = int_to_ptr.hbm [resolvable:$true] %s44
      %s46 = sshll.u32 [#allocation7], 4
      %s47 = int_to_ptr.vmem [resolvable:$true] %s46
      %52 = dma.hbm_to_vmem [thread:$0]  %s45, 256, %s47, [#allocation6], 128, 128, 8
    $region13: #{tpu_custom_call.1} parent=1 // pred_fallthru
      _
    // Predicated region
    $region14: #{tpu_custom_call.1} parent=1 // pred_check
      _
    $region15: #{tpu_custom_call.1} parent=1 // pred_check_branch
      %54 = sbr.rel (0) target = $region17
    $region16: #{tpu_custom_call.1} parent=1 // pred_region
      %56 = dma.done [#allocation3], 256
    $region17: #{tpu_custom_call.1} parent=1 // pred_fallthru
      _
    // Predicated region
    $region18: #{tpu_custom_call.1} parent=1 // pred_check
      _
    $region19: #{tpu_custom_call.1} parent=1 // pred_check_branch
      %58 = sbr.rel (0) target = $region21
    $region20: #{tpu_custom_call.1} parent=1 // pred_region
      %60 = dma.done [#allocation6], 256
    $region21: #{tpu_custom_call.1} parent=1 // pred_fallthru
      _
    // Predicated region
    $region22: #{tpu_custom_call.1} parent=1 // pred_check
      _
    $region23: #{tpu_custom_call.1} parent=1 // pred_check_branch
      %62 = sbr.rel (0) target = $region25
    $region24: #{tpu_custom_call.1} parent=1 // pred_region
      %64 = dma.done [#allocation6], 256
    $region25: #{tpu_custom_call.1} parent=1 // pred_fallthru
      _
    %v65 = vld [vmem:[#allocation2] sm:$0xff]
    %v66 = vld [vmem:[#allocation2 + $0x8] sm:$0xff]
    %v67 = vmul.f32 %v65, 0.17677669
    %v68 = vmul.f32 %v66, 0.17677669
    %v69 = vld [vmem:[#allocation5] sm:$0xff]
    %v70 = vld [vmem:[#allocation5 + $0x8] sm:$0xff]
    %v71 = vld [vmem:[#allocation7] sm:$0xff]
    %v72 = vld [vmem:[#allocation7 + $0x8] sm:$0xff]
    %vm73 = vcmask 261120
    %v75 = vsel %vm73, %v67, 0
    %v78 = vsel %vm73, %v69, 0
    %80 = vmatpush.xpose.msra.mxu0 0.0
    %81 = vmatpush.xpose.msra.mxu0 0.0
    %82 = vmatpush.xpose.msra.mxu0 0.0
    %83 = vmatpush.xpose.msra.mxu0 0.0
    %84 = vmatpush.xpose.msra.mxu0 0.0
    %85 = vmatpush.xpose.msra.mxu0 0.0
    %86 = vmatpush.xpose.msra.mxu0 0.0
    %87 = vmatpush.xpose.msra.mxu0 0.0
    %88 = vmatpush.xpose.msra.mxu0 0.0
    %89 = vmatpush.xpose.msra.mxu0 0.0
    %90 = vmatpush.xpose.msra.mxu0 0.0
    %91 = vmatpush.xpose.msra.mxu0 0.0
    %92 = vmatpush.xpose.msra.mxu0 0.0
    %93 = vmatpush.xpose.msra.mxu0 0.0
    %94 = vmatpush.xpose.msra.mxu0 0.0
    %95 = vmatpush.xpose.msra.mxu0 %v78
    %96 = vmatmul.f32.gmra.mxu0 %v75
    %v97 = vpop.f32.mrf.mxu0
    %v98 = vadd.f32 0.0, %v97
    %99 = vdwg.mxu0
    %v101 = vsel %vm73, %v68, 0
    %v104 = vsel %vm73, %v70, 0
    %106 = vmatpush.xpose.msra.mxu0 0.0
    %107 = vmatpush.xpose.msra.mxu0 0.0
    %108 = vmatpush.xpose.msra.mxu0 0.0
    %109 = vmatpush.xpose.msra.mxu0 0.0
    %110 = vmatpush.xpose.msra.mxu0 0.0
    %111 = vmatpush.xpose.msra.mxu0 0.0
    %112 = vmatpush.xpose.msra.mxu0 0.0
    %113 = vmatpush.xpose.msra.mxu0 0.0
    %114 = vmatpush.xpose.msra.mxu0 0.0
    %115 = vmatpush.xpose.msra.mxu0 0.0
    %116 = vmatpush.xpose.msra.mxu0 0.0
    %117 = vmatpush.xpose.msra.mxu0 0.0
    %118 = vmatpush.xpose.msra.mxu0 0.0
    %119 = vmatpush.xpose.msra.mxu0 0.0
    %120 = vmatpush.xpose.msra.mxu0 0.0
    %121 = vmatpush.xpose.msra.mxu0 %v104
    %122 = vmatmul.f32.gmra.mxu0 %v101
    %v123 = vpop.f32.mrf.mxu0
    %v124 = vadd.f32 0.0, %v123
    %125 = vdwg.mxu0
    %vm126 = vcmask 64512
    %v127 = vsel %vm126, %v98, -inf
    %128 = vmax.xlane.f32.xlu0 %v127
    %v129 = vpop.xlane.xlu0 %128
    %v130 = vsel %vm126, %v124, -inf
    %131 = vmax.xlane.f32.xlu0 %v130
    %v132 = vpop.xlane.xlu0 %131
    %v133 = vsub.f32 %v98, %v129
    %v134 = vsub.f32 %v124, %v132
    %v135 = vmul.f32 %v133, 1.442695
    %v136 = vpow.pop %v135
    %v137 = vmul.f32 %v134, 1.442695
    %v138 = vpow.pop %v137
    %v139 = vsel %vm126, %v136, 0.0
    %140 = vadd.xlane.f32.xlu0 %v139
    %v141 = vpop.xlane.xlu0 %140
    %v142 = vsel %vm126, %v138, 0.0
    %143 = vadd.xlane.f32.xlu0 %v142
    %v144 = vpop.xlane.xlu0 %143
    %v145 = vrcp.pop %v141
    %v146 = vrcp.pop %v144
    %v147 = vmul.f32 %v136, %v145
    %v148 = vmul.f32 %v138, %v146
    %149 = vst.msk [vmem:[#allocation9] sm:$0xff] %vm126, %v147
    %150 = vst.msk [vmem:[#allocation9 + $0x8] sm:$0xff] %vm126, %v148
    %v152 = vsel %vm126, %v147, 0
    %154 = vmatpush.msra.mxu0 0.0
    %155 = vmatpush.msra.mxu0 0.0
    %156 = vmatpush.msra.mxu0 0.0
    %157 = vmatpush.msra.mxu0 0.0
    %158 = vmatpush.msra.mxu0 0.0
    %159 = vmatpush.msra.mxu0 0.0
    %160 = vmatpush.msra.mxu0 0.0
    %161 = vmatpush.msra.mxu0 0.0
    %162 = vmatpush.msra.mxu0 0.0
    %163 = vmatpush.msra.mxu0 0.0
    %164 = vmatpush.msra.mxu0 0.0
    %165 = vmatpush.msra.mxu0 0.0
    %166 = vmatpush.msra.mxu0 0.0
    %167 = vmatpush.msra.mxu0 0.0
    %168 = vmatpush.msra.mxu0 0.0
    %169 = vmatpush.msra.mxu0 %v71
    %170 = vmatmul.f32.gmra.mxu0 %v152
    %v171 = vpop.f32.mrf.mxu0
    %v172 = vadd.f32 0.0, %v171
    %173 = vdwg.mxu0
    %v175 = vsel %vm126, %v148, 0
    %177 = vmatpush.msra.mxu0 0.0
    %178 = vmatpush.msra.mxu0 0.0
    %179 = vmatpush.msra.mxu0 0.0
    %180 = vmatpush.msra.mxu0 0.0
    %181 = vmatpush.msra.mxu0 0.0
    %182 = vmatpush.msra.mxu0 0.0
    %183 = vmatpush.msra.mxu0 0.0
    %184 = vmatpush.msra.mxu0 0.0
    %185 = vmatpush.msra.mxu0 0.0
    %186 = vmatpush.msra.mxu0 0.0
    %187 = vmatpush.msra.mxu0 0.0
    %188 = vmatpush.msra.mxu0 0.0
    %189 = vmatpush.msra.mxu0 0.0
    %190 = vmatpush.msra.mxu0 0.0
    %191 = vmatpush.msra.mxu0 0.0
    %192 = vmatpush.msra.mxu0 %v72
    %193 = vmatmul.f32.gmra.mxu0 %v175
    %v194 = vpop.f32.mrf.mxu0
    %v195 = vadd.f32 0.0, %v194
    %196 = vdwg.mxu0
    %197 = vst.msk [vmem:[#allocation8] sm:$0xff] %vm73, %v172
    %198 = vst.msk [vmem:[#allocation8 + $0x8] sm:$0xff] %vm73, %v195
    // Predicated region
    $region26: #{tpu_custom_call.1} parent=1 // pred_check
      _
    $region27: #{tpu_custom_call.1} parent=1 // pred_check_branch
      %200 = sbr.rel (0) target = $region29
    $region28: #{tpu_custom_call.1} parent=1 // pred_region
      %202 = vsyncadd [#allocation4], 0
      %s203 = sshll.u32 [#allocation8], 4
      %s204 = int_to_ptr.vmem [resolvable:$true] %s203
      %s205 = sshll.u32 %s3, 4
      %s206 = int_to_ptr.hbm [resolvable:$true] %s205
      %211 = dma.vmem_to_hbm [thread:$0]  %s204, 256, %s206, [#allocation4], 128, 128, 8
    $region29: #{tpu_custom_call.1} parent=1 // pred_fallthru
      _
    // Predicated region
    $region30: #{tpu_custom_call.1} parent=1 // pred_check
      _
    $region31: #{tpu_custom_call.1} parent=1 // pred_check_branch
      %213 = sbr.rel (0) target = $region33
    $region32: #{tpu_custom_call.1} parent=1 // pred_region
      %215 = vsyncadd [#allocation10], 0
      %s216 = sshll.u32 [#allocation9], 4
      %s217 = int_to_ptr.vmem [resolvable:$true] %s216
      %s218 = sshll.u32 %s4, 4
      %s219 = int_to_ptr.hbm [resolvable:$true] %s218
      %224 = dma.vmem_to_hbm [thread:$0]  %s217, 256, %s219, [#allocation10], 128, 128, 8
    $region33: #{tpu_custom_call.1} parent=1 // pred_fallthru
      _
    // Predicated region
    $region34: #{tpu_custom_call.1} parent=1 // pred_check
      _
    $region35: #{tpu_custom_call.1} parent=1 // pred_check_branch
      %226 = sbr.rel (0) target = $region37
    $region36: #{tpu_custom_call.1} parent=1 // pred_region
      %228 = dma.done [#allocation4], 256
    $region37: #{tpu_custom_call.1} parent=1 // pred_fallthru
      _
    // Predicated region
    $region38: #{tpu_custom_call.1} parent=1 // pred_check
      _
    $region39: #{tpu_custom_call.1} parent=1 // pred_check_branch
      %230 = sbr.rel (0) target = $region41
    $region40: #{tpu_custom_call.1} parent=1 // pred_region
      %232 = dma.done [#allocation10], 256
    $region41: #{tpu_custom_call.1} parent=1 // pred_fallthru
      _
    %233 = vsyncpa [#allocation3], 1
    %234 = vsyncpa [#allocation6], 1
    %235 = vsyncpa [#allocation4], 1
    %236 = vsyncpa [#allocation10], 1

</llo_original>
